<compile_context>
chip_gen: v7x
topology: tpu7x:2x2x1
jax: 0.10.0
libtpu: 0.0.40
codegen_flags: <defaults>
</compile_context>

<pallas_src>
import functools

import jax
import jax.numpy as jnp
from jax.experimental import pallas as pl
from jax.experimental.pallas import tpu as pltpu

N_IN = 2
H1 = 100
H2 = 200
N_OUT = 3

# Lane-aligned (multiple-of-128) padded feature widths.
H1_P = 128
H2_P = 256
OUT_P = 128


def _round_up(n, m):
    return ((n + m - 1) // m) * m


def _sigmoid(x, approx):
    if approx:
        # exp on the EUP + approximate reciprocal on the EUP -> VALU-free.
        return pl.reciprocal(1.0 + jnp.exp(-x), approx=True)
    return jax.nn.sigmoid(x)


def mlp_kernel(x_ref, w1_ref, b1_ref, w2_ref, b2_ref, w3_ref, b3_ref, o_ref,
               *, approx_sigmoid):
    x = x_ref[...].astype(jnp.float32)                       # (bb, 2)

    # fc1: K=2 contraction -> VPU broadcast-FMA (keeps the MXU free).
    w1 = w1_ref[...].astype(jnp.float32)                     # (2, H1_P)
    h = (x[:, 0:1] * w1[0:1, :]
         + x[:, 1:2] * w1[1:2, :]
         + b1_ref[...])                                       # (bb, H1_P)
    h = _sigmoid(h, approx_sigmoid)

    # fc2 + sigmoid: MXU matmul, f32 accumulation.
    h = jnp.dot(h.astype(w2_ref.dtype), w2_ref[...],
                preferred_element_type=jnp.float32) + b2_ref[...]
    h = _sigmoid(h, approx_sigmoid)

    # fc3 (no activation).
    out = jnp.dot(h.astype(w3_ref.dtype), w3_ref[...],
                  preferred_element_type=jnp.float32) + b3_ref[...]
    o_ref[...] = out.astype(o_ref.dtype)


def my_neural_net_forward(x, padded_params, *, block_batch=512):
    """x: (batch, N_IN) float32 -> (batch, N_OUT) float32."""
    w1, b1, w2, b2, w3, b3 = padded_params
    batch = x.shape[0]

    # Batch tile: a multiple of 8 sublanes, at most `block_batch` rows.
    bb = min(block_batch, _round_up(batch, 8))
    padded_batch = _round_up(batch, bb)
    if padded_batch != batch:
        x = jnp.pad(x, ((0, padded_batch - batch), (0, 0)))

    approx_sigmoid = (w2.dtype == jnp.bfloat16)
    kernel = functools.partial(mlp_kernel, approx_sigmoid=approx_sigmoid)

    const = lambda i: (0, 0)   # weights/biases stay resident (no re-DMA)
    out = pl.pallas_call(
        kernel,
        out_shape=jax.ShapeDtypeStruct((padded_batch, OUT_P), jnp.float32),
        grid=(padded_batch // bb,),
        in_specs=[
            pl.BlockSpec((bb, N_IN), lambda i: (i, 0)),     # x (batch-tiled)
            pl.BlockSpec((N_IN, H1_P), const),              # w1
            pl.BlockSpec((1, H1_P), const),                 # b1
            pl.BlockSpec((H1_P, H2_P), const),              # w2
            pl.BlockSpec((1, H2_P), const),                 # b2
            pl.BlockSpec((H2_P, OUT_P), const),             # w3
            pl.BlockSpec((1, OUT_P), const),                # b3
        ],
        out_specs=pl.BlockSpec((bb, OUT_P), lambda i: (i, 0)),
        compiler_params=pltpu.CompilerParams(
            dimension_semantics=("parallel",),
        ),
    )(x, w1, b1, w2, b2, w3, b3)

    return out[:batch, :N_OUT]


def init_params(key):
    """Unpadded params mimicking nn.Linear's uniform(-1/sqrt(fan_in), ...).

    Weights stored as (in_features, out_features) so the forward is x @ W + b
    (equivalent to PyTorch's x @ W.T with W of shape (out, in))."""
    def linear(key, fan_in, fan_out):
        kw, kb = jax.random.split(key)
        bound = 1.0 / jnp.sqrt(jnp.float32(fan_in))
        w = jax.random.uniform(kw, (fan_in, fan_out), jnp.float32, -bound, bound)
        b = jax.random.uniform(kb, (1, fan_out), jnp.float32, -bound, bound)
        return w, b

    k1, k2, k3 = jax.random.split(key, 3)
    w1, b1 = linear(k1, N_IN, H1)
    w2, b2 = linear(k2, H1, H2)
    w3, b3 = linear(k3, H2, N_OUT)
    return (w1, b1, w2, b2, w3, b3)


def pad_params(params, use_bf16=False):
    """Zero-pad features to lane-aligned widths (done once, not per call)."""
    w1, b1, w2, b2, w3, b3 = params
    w1p = jnp.pad(w1, ((0, 0), (0, H1_P - H1)))
    b1p = jnp.pad(b1, ((0, 0), (0, H1_P - H1)))
    w2p = jnp.pad(w2, ((0, H1_P - H1), (0, H2_P - H2)))   # padded rows = 0
    b2p = jnp.pad(b2, ((0, 0), (0, H2_P - H2)))
    w3p = jnp.pad(w3, ((0, H2_P - H2), (0, OUT_P - N_OUT)))
    b3p = jnp.pad(b3, ((0, 0), (0, OUT_P - N_OUT)))
    if use_bf16:
        # bf16 only on the MXU operand path; biases / elementwise stay f32.
        w2p = w2p.astype(jnp.bfloat16)
        w3p = w3p.astype(jnp.bfloat16)
    return (w1p, b1p, w2p, b2p, w3p, b3p)


def reference_forward(x, params):
    w1, b1, w2, b2, w3, b3 = params
    h = jax.nn.sigmoid(x @ w1 + b1)
    h = jax.nn.sigmoid(h @ w2 + b2)
    return h @ w3 + b3


if __name__ == "__main__":
    key = jax.random.PRNGKey(0)
    kx, kp, kx2 = jax.random.split(key, 3)

    raw_params = init_params(kp)
    params_f32 = pad_params(raw_params, use_bf16=False)
    params_bf16 = pad_params(raw_params, use_bf16=True)

    # Small batch (single grid step).
    batch = 8
    x = jax.random.normal(kx, (batch, N_IN), dtype=jnp.float32)
    out = jax.block_until_ready(my_neural_net_forward(x, params_f32))
    ref = reference_forward(x, raw_params)
    assert out.shape == (batch, N_OUT)
    assert jnp.allclose(out, ref, atol=1e-5, rtol=1e-5)

    # Larger, non-aligned batch exercising the batch-tiled grid + pad/slice.
    batch2 = 1000
    x2 = jax.random.normal(kx2, (batch2, N_IN), dtype=jnp.float32)
    out2 = jax.block_until_ready(my_neural_net_forward(x2, params_f32))
    ref2 = reference_forward(x2, raw_params)
    assert out2.shape == (batch2, N_OUT)
    assert jnp.allclose(out2, ref2, atol=1e-5, rtol=1e-5)

    # bf16 MXU path (looser tolerance).
    out_bf16 = jax.block_until_ready(my_neural_net_forward(x2, params_bf16))
    assert jnp.allclose(out_bf16, ref2, atol=5e-2, rtol=5e-2)

    print("KERNEL_OK")
</pallas_src>

<mosaic_0001>
module attributes {stable_mosaic.version = 11 : i64} {
  func.func @mlp_kernel(%arg0: i32, %arg1: memref<8x2xf32, #tpu.memory_space<vmem>>, %arg2: memref<2x128xf32, #tpu.memory_space<vmem>>, %arg3: memref<1x128xf32, #tpu.memory_space<vmem>>, %arg4: memref<128x256xf32, #tpu.memory_space<vmem>>, %arg5: memref<1x256xf32, #tpu.memory_space<vmem>>, %arg6: memref<256x128xf32, #tpu.memory_space<vmem>>, %arg7: memref<1x128xf32, #tpu.memory_space<vmem>>, %arg8: memref<8x128xf32, #tpu.memory_space<vmem>>) attributes {dimension_semantics = [#tpu.dimension_semantics<parallel>], iteration_bounds = array<i64: 1>, scalar_prefetch = 0 : i64, scratch_operands = 0 : i64, tpu.core_type = #tpu.core_type<tc>, window_params = [{transform_indices = @transform_0, window_bounds = array<i64: 8, 2>}, {pipeline_mode = #tpu.pipeline_mode<synchronous>, transform_indices = @transform_1, window_bounds = array<i64: 2, 128>}, {pipeline_mode = #tpu.pipeline_mode<synchronous>, transform_indices = @transform_2, window_bounds = array<i64: 1, 128>}, {pipeline_mode = #tpu.pipeline_mode<synchronous>, transform_indices = @transform_3, window_bounds = array<i64: 128, 256>}, {pipeline_mode = #tpu.pipeline_mode<synchronous>, transform_indices = @transform_4, window_bounds = array<i64: 1, 256>}, {pipeline_mode = #tpu.pipeline_mode<synchronous>, transform_indices = @transform_5, window_bounds = array<i64: 256, 128>}, {pipeline_mode = #tpu.pipeline_mode<synchronous>, transform_indices = @transform_6, window_bounds = array<i64: 1, 128>}, {transform_indices = @transform_7, window_bounds = array<i64: 8, 128>}]} {
    %c0 = arith.constant 0 : index
    %c0_0 = arith.constant 0 : index
    %0 = vector.load %arg1[%c0, %c0_0] : memref<8x2xf32, #tpu.memory_space<vmem>>, vector<8x2xf32>
    %c0_1 = arith.constant 0 : index
    %c0_2 = arith.constant 0 : index
    %1 = vector.load %arg2[%c0_1, %c0_2] : memref<2x128xf32, #tpu.memory_space<vmem>>, vector<2x128xf32>
    %2 = vector.extract_strided_slice %0 {offsets = [0, 0], sizes = [8, 1], strides = [1, 1]} : vector<8x2xf32> to vector<8x1xf32>
    %3 = vector.extract_strided_slice %1 {offsets = [0, 0], sizes = [1, 128], strides = [1, 1]} : vector<2x128xf32> to vector<1x128xf32>
    %4 = vector.broadcast %2 : vector<8x1xf32> to vector<8x128xf32>
    %5 = vector.broadcast %3 : vector<1x128xf32> to vector<8x128xf32>
    %6 = arith.mulf %4, %5 : vector<8x128xf32>
    %7 = vector.extract_strided_slice %0 {offsets = [0, 1], sizes = [8, 1], strides = [1, 1]} : vector<8x2xf32> to vector<8x1xf32>
    %8 = vector.extract_strided_slice %1 {offsets = [1, 0], sizes = [1, 128], strides = [1, 1]} : vector<2x128xf32> to vector<1x128xf32>
    %9 = vector.broadcast %7 : vector<8x1xf32> to vector<8x128xf32>
    %10 = vector.broadcast %8 : vector<1x128xf32> to vector<8x128xf32>
    %11 = arith.mulf %9, %10 : vector<8x128xf32>
    %12 = arith.addf %6, %11 : vector<8x128xf32>
    %c0_3 = arith.constant 0 : index
    %c0_4 = arith.constant 0 : index
    %13 = vector.load %arg3[%c0_3, %c0_4] : memref<1x128xf32, #tpu.memory_space<vmem>>, vector<1x128xf32>
    %14 = vector.broadcast %13 : vector<1x128xf32> to vector<8x128xf32>
    %15 = arith.addf %12, %14 : vector<8x128xf32>
    %16 = arith.negf %15 : vector<8x128xf32>
    %17 = math.exp %16 : vector<8x128xf32>
    %cst = arith.constant 1.000000e+00 : f32
    %18 = vector.broadcast %cst : f32 to vector<8x128xf32>
    %19 = arith.addf %18, %17 : vector<8x128xf32>
    %20 = arith.divf %18, %19 : vector<8x128xf32>
    %c0_5 = arith.constant 0 : index
    %c0_6 = arith.constant 0 : index
    %21 = vector.load %arg4[%c0_5, %c0_6] : memref<128x256xf32, #tpu.memory_space<vmem>>, vector<128x256xf32>
    %cst_7 = arith.constant dense<0.000000e+00> : vector<8x256xf32>
    %22 = tpu.matmul %20, %21, %cst_7 {dimension_numbers = #tpu.dot_dimension_numbers<[1], [0], [0], [1], [0, 0, 1, 1], [], []>} : vector<8x128xf32>, vector<128x256xf32>, vector<8x256xf32> -> vector<8x256xf32>
    %c0_8 = arith.constant 0 : index
    %c0_9 = arith.constant 0 : index
    %23 = vector.load %arg5[%c0_8, %c0_9] : memref<1x256xf32, #tpu.memory_space<vmem>>, vector<1x256xf32>
    %24 = vector.broadcast %23 : vector<1x256xf32> to vector<8x256xf32>
    %25 = arith.addf %22, %24 : vector<8x256xf32>
    %26 = arith.negf %25 : vector<8x256xf32>
    %27 = math.exp %26 : vector<8x256xf32>
    %cst_10 = arith.constant 1.000000e+00 : f32
    %28 = vector.broadcast %cst_10 : f32 to vector<8x256xf32>
    %29 = arith.addf %28, %27 : vector<8x256xf32>
    %30 = arith.divf %28, %29 : vector<8x256xf32>
    %c0_11 = arith.constant 0 : index
    %c0_12 = arith.constant 0 : index
    %31 = vector.load %arg6[%c0_11, %c0_12] : memref<256x128xf32, #tpu.memory_space<vmem>>, vector<256x128xf32>
    %cst_13 = arith.constant dense<0.000000e+00> : vector<8x128xf32>
    %32 = tpu.matmul %30, %31, %cst_13 {dimension_numbers = #tpu.dot_dimension_numbers<[1], [0], [0], [1], [0, 0, 1, 1], [], []>} : vector<8x256xf32>, vector<256x128xf32>, vector<8x128xf32> -> vector<8x128xf32>
    %c0_14 = arith.constant 0 : index
    %c0_15 = arith.constant 0 : index
    %33 = vector.load %arg7[%c0_14, %c0_15] : memref<1x128xf32, #tpu.memory_space<vmem>>, vector<1x128xf32>
    %34 = vector.broadcast %33 : vector<1x128xf32> to vector<8x128xf32>
    %35 = arith.addf %32, %34 : vector<8x128xf32>
    %c0_16 = arith.constant 0 : index
    %c0_17 = arith.constant 0 : index
    %36 = vector.load %arg8[%c0_16, %c0_17] : memref<8x128xf32, #tpu.memory_space<vmem>>, vector<8x128xf32>
    tpu.vector_store %arg8[%c0_16, %c0_17], %35 {strides = array<i32>} : memref<8x128xf32, #tpu.memory_space<vmem>>, vector<8x128xf32>,
    return
  }
  func.func @transform_0(%arg0: i32) -> (i32, i32) {
    %c0_i32 = arith.constant 0 : i32
    %c0_i32_0 = arith.constant 0 : i32
    return %arg0, %c0_i32 : i32, i32
  }
  func.func @transform_1(%arg0: i32) -> (i32, i32) {
    %c0_i32 = arith.constant 0 : i32
    %c0_i32_0 = arith.constant 0 : i32
    %c0_i32_1 = arith.constant 0 : i32
    return %c0_i32, %c0_i32_0 : i32, i32
  }
  func.func @transform_2(%arg0: i32) -> (i32, i32) {
    %c0_i32 = arith.constant 0 : i32
    %c0_i32_0 = arith.constant 0 : i32
    %c0_i32_1 = arith.constant 0 : i32
    return %c0_i32, %c0_i32_0 : i32, i32
  }
  func.func @transform_3(%arg0: i32) -> (i32, i32) {
    %c0_i32 = arith.constant 0 : i32
    %c0_i32_0 = arith.constant 0 : i32
    %c0_i32_1 = arith.constant 0 : i32
    return %c0_i32, %c0_i32_0 : i32, i32
  }
  func.func @transform_4(%arg0: i32) -> (i32, i32) {
    %c0_i32 = arith.constant 0 : i32
    %c0_i32_0 = arith.constant 0 : i32
    %c0_i32_1 = arith.constant 0 : i32
    return %c0_i32, %c0_i32_0 : i32, i32
  }
  func.func @transform_5(%arg0: i32) -> (i32, i32) {
    %c0_i32 = arith.constant 0 : i32
    %c0_i32_0 = arith.constant 0 : i32
    %c0_i32_1 = arith.constant 0 : i32
    return %c0_i32, %c0_i32_0 : i32, i32
  }
  func.func @transform_6(%arg0: i32) -> (i32, i32) {
    %c0_i32 = arith.constant 0 : i32
    %c0_i32_0 = arith.constant 0 : i32
    %c0_i32_1 = arith.constant 0 : i32
    return %c0_i32, %c0_i32_0 : i32, i32
  }
  func.func @transform_7(%arg0: i32) -> (i32, i32) {
    %c0_i32 = arith.constant 0 : i32
    %c0_i32_0 = arith.constant 0 : i32
    return %arg0, %c0_i32 : i32, i32
  }
}

</mosaic_0001>

<llo_original>
// kernel: tpu_custom_call.1
$region0: #{tpu_custom_call.1}
  #allocation0 [shape = 'u32[]', space=smem, size = 0x4, offset = 0x4, fixed_abs, tag = 'smem constant byte address 0x4 - core index']
  #allocation1 [shape = 'u32[144,128]{1,0:T(1,128)}', space=vmem, size = 0x12000, scoped, tag = 'internal scratch']
  %s0 = inlined_call_operand.vmem [shape: f32[8,2], index: 0, kind: input, shape index: {}]
  %s1 = inlined_call_operand.vmem [shape: f32[2,128], index: 1, kind: input, shape index: {}]
  %s2 = inlined_call_operand.vmem [shape: f32[1,128], index: 2, kind: input, shape index: {}]
  %s3 = inlined_call_operand.hbm [shape: f32[128,256], index: 3, kind: input, shape index: {}]
  %s4 = inlined_call_operand.vmem [shape: f32[1,256], index: 4, kind: input, shape index: {}]
  %s5 = inlined_call_operand.hbm [shape: f32[256,128], index: 5, kind: input, shape index: {}]
  %s6 = inlined_call_operand.vmem [shape: f32[1,128], index: 6, kind: input, shape index: {}]
  %s7 = inlined_call_operand.hbm [shape: f32[8,128], index: 7, kind: output, shape index: {}]
  %s8 = sld [smem:[#allocation0]]
  $region46: #{tpu_custom_call.1} parent=0
    _
  %s10 = ssub.s32 1, %s8
  %s11 = scalar_select 0, %s10, %s8
  $region1: #{tpu_custom_call.1} parent=0
    #allocation2 [shape = 'u8[131072]{0}', space=vmem, size = 0x20000, scoped, tag = 'input window, operand 3, single buffered']
    #allocation3 [shape = 's32[1]{0}', space=sflag, size = 0x4, scoped, tag = 'scoped memory for tpu_custom_call.1']
    #allocation4 [shape = 's32[1]{0}', space=sflag, size = 0x4, scoped, tag = 'scoped memory for tpu_custom_call.1']
    #allocation5 [shape = 'u8[131072]{0}', space=vmem, size = 0x20000, scoped, tag = 'input window, operand 5, single buffered']
    #allocation6 [shape = 's32[1]{0}', space=sflag, size = 0x4, scoped, tag = 'scoped memory for tpu_custom_call.1']
    #allocation7 [shape = 'u8[4096]{0}', space=vmem, size = 0x1000, scoped, tag = 'output window, operand 0, single buffered']
    %12 = vsyncpa [#allocation3], 0
    %13 = vsyncpa [#allocation6], 0
    %14 = vsyncpa [#allocation4], 0
    // Predicated region
    $region2: #{tpu_custom_call.1} parent=1 // pred_check
      _
    $region3: #{tpu_custom_call.1} parent=1 // pred_check_branch
      %16 = sbr.rel (0) target = $region5
    $region4: #{tpu_custom_call.1} parent=1 // pred_region
      _
    $region5: #{tpu_custom_call.1} parent=1 // pred_fallthru
      _
    // Predicated region
    $region6: #{tpu_custom_call.1} parent=1 // pred_check
      _
    $region7: #{tpu_custom_call.1} parent=1 // pred_check_branch
      %18 = sbr.rel (0) target = $region9
    $region8: #{tpu_custom_call.1} parent=1 // pred_region
      _
    $region9: #{tpu_custom_call.1} parent=1 // pred_fallthru
      _
    // Predicated region
    $region10: #{tpu_custom_call.1} parent=1 // pred_check
      _
    $region11: #{tpu_custom_call.1} parent=1 // pred_check_branch
      %20 = sbr.rel (0) target = $region13
    $region12: #{tpu_custom_call.1} parent=1 // pred_region
      _
    $region13: #{tpu_custom_call.1} parent=1 // pred_fallthru
      _
    // Predicated region
    $region14: #{tpu_custom_call.1} parent=1 // pred_check
      _
    $region15: #{tpu_custom_call.1} parent=1 // pred_check_branch
      %22 = sbr.rel (0) target = $region17
    $region16: #{tpu_custom_call.1} parent=1 // pred_region
      %s24 = ssub.s32 4096, 4096
      %25 = vsyncadd [#allocation3], %s24
      %s26 = sshll.u32 [#allocation2], 4
      %s27 = int_to_ptr.vmem [resolvable:$true] %s26
      %32 = dma.hbm_to_vmem [thread:$0]  %s3, 4096, %s27, [#allocation3], 256, 256, 16
    $region17: #{tpu_custom_call.1} parent=1 // pred_fallthru
      _
    // Predicated region
    $region18: #{tpu_custom_call.1} parent=1 // pred_check
      _
    $region19: #{tpu_custom_call.1} parent=1 // pred_check_branch
      %34 = sbr.rel (0) target = $region21
    $region20: #{tpu_custom_call.1} parent=1 // pred_region
      _
    $region21: #{tpu_custom_call.1} parent=1 // pred_fallthru
      _
    // Predicated region
    $region22: #{tpu_custom_call.1} parent=1 // pred_check
      _
    $region23: #{tpu_custom_call.1} parent=1 // pred_check_branch
      %36 = sbr.rel (0) target = $region25
    $region24: #{tpu_custom_call.1} parent=1 // pred_region
      %s38 = ssub.s32 4096, 4096
      %39 = vsyncadd [#allocation6], %s38
      %s40 = sshll.u32 [#allocation5], 4
      %s41 = int_to_ptr.vmem [resolvable:$true] %s40
      %46 = dma.hbm_to_vmem [thread:$0]  %s5, 4096, %s41, [#allocation6], 128, 128, 8
    $region25: #{tpu_custom_call.1} parent=1 // pred_fallthru
      _
    // Predicated region
    $region26: #{tpu_custom_call.1} parent=1 // pred_check
      _
    $region27: #{tpu_custom_call.1} parent=1 // pred_check_branch
      %48 = sbr.rel (0) target = $region29
    $region28: #{tpu_custom_call.1} parent=1 // pred_region
      _
    $region29: #{tpu_custom_call.1} parent=1 // pred_fallthru
      _
    // Predicated region
    $region30: #{tpu_custom_call.1} parent=1 // pred_check
      _
    $region31: #{tpu_custom_call.1} parent=1 // pred_check_branch
      %50 = sbr.rel (0) target = $region33
    $region32: #{tpu_custom_call.1} parent=1 // pred_region
      %51 = dma.done [#allocation3], 4096
    $region33: #{tpu_custom_call.1} parent=1 // pred_fallthru
      _
    // Predicated region
    $region34: #{tpu_custom_call.1} parent=1 // pred_check
      _
    $region35: #{tpu_custom_call.1} parent=1 // pred_check_branch
      %53 = sbr.rel (0) target = $region37
    $region36: #{tpu_custom_call.1} parent=1 // pred_region
      %54 = dma.done [#allocation6], 4096
    $region37: #{tpu_custom_call.1} parent=1 // pred_fallthru
      _
    %v55 = vld [vmem:[%s0] sm:$0xff]
    %v56 = vld [vmem:[%s1] sm:$0x3]
    %58 = vset.pattern.permute.xlu0 0
    %59 = vperm.xlu0 %58, %v55
    %v60 = vpop.permute.xlu0 %59
    %v62 = vlaneseq
    %v63 = vshrl.u32 %v62, 7
    %v64 = vsub.s32 0, %v63
    %v65 = vrot.slane %v56, %v64
    %v66 = vmul.f32 %v60, %v65
    %67 = vset.pattern.permute.xlu0 1
    %68 = vperm.xlu0 %67, %v55
    %v69 = vpop.permute.xlu0 %68
    %v71 = vlaneseq
    %v72 = vshrl.u32 %v71, 7
    %v73 = vsub.s32 1, %v72
    %v74 = vrot.slane %v56, %v73
    %v75 = vmul.f32 %v69, %v74
    %v76 = vadd.f32 %v66, %v75
    %v77 = vld [vmem:[%s2] sm:$0x1]
    %v79 = vlaneseq
    %v80 = vshrl.u32 %v79, 7
    %v81 = vsub.s32 0, %v80
    %v82 = vrot.slane %v77, %v81
    %v84 = vadd.f32 %v76, %v82
    %v85 = vxor.u32 %v84, 2147483648
    %v86 = vmul.f32 %v85, 1.442695
    %v87 = vpow.pop %v86
    %v88 = vadd.f32 %v87, 1.0
    %v89 = vrcp.pop %v88
    %v90 = vmul.f32 1.0, %v89
    %v91 = vld [vmem:[#allocation2] sm:$0xff]
    %v92 = vld [vmem:[#allocation2 + $0x8] sm:$0xff]
    %v93 = vld [vmem:[#allocation2 + $0x10] sm:$0xff]
    %v94 = vld [vmem:[#allocation2 + $0x18] sm:$0xff]
    %v95 = vld [vmem:[#allocation2 + $0x20] sm:$0xff]
    %v96 = vld [vmem:[#allocation2 + $0x28] sm:$0xff]
    %v97 = vld [vmem:[#allocation2 + $0x30] sm:$0xff]
    %v98 = vld [vmem:[#allocation2 + $0x38] sm:$0xff]
    %v99 = vld [vmem:[#allocation2 + $0x40] sm:$0xff]
    %v100 = vld [vmem:[#allocation2 + $0x48] sm:$0xff]
    %v101 = vld [vmem:[#allocation2 + $0x50] sm:$0xff]
    %v102 = vld [vmem:[#allocation2 + $0x58] sm:$0xff]
    %v103 = vld [vmem:[#allocation2 + $0x60] sm:$0xff]
    %v104 = vld [vmem:[#allocation2 + $0x68] sm:$0xff]
    %v105 = vld [vmem:[#allocation2 + $0x70] sm:$0xff]
    %v106 = vld [vmem:[#allocation2 + $0x78] sm:$0xff]
    %v107 = vld [vmem:[#allocation2 + $0x80] sm:$0xff]
    %v108 = vld [vmem:[#allocation2 + $0x88] sm:$0xff]
    %v109 = vld [vmem:[#allocation2 + $0x90] sm:$0xff]
    %v110 = vld [vmem:[#allocation2 + $0x98] sm:$0xff]
    %v111 = vld [vmem:[#allocation2 + $0xa0] sm:$0xff]
    %v112 = vld [vmem:[#allocation2 + $0xa8] sm:$0xff]
    %v113 = vld [vmem:[#allocation2 + $0xb0] sm:$0xff]
    %v114 = vld [vmem:[#allocation2 + $0xb8] sm:$0xff]
    %v115 = vld [vmem:[#allocation2 + $0xc0] sm:$0xff]
    %v116 = vld [vmem:[#allocation2 + $0xc8] sm:$0xff]
    %v117 = vld [vmem:[#allocation2 + $0xd0] sm:$0xff]
    %v118 = vld [vmem:[#allocation2 + $0xd8] sm:$0xff]
    %v119 = vld [vmem:[#allocation2 + $0xe0] sm:$0xff]
    %v120 = vld [vmem:[#allocation2 + $0xe8] sm:$0xff]
    %v121 = vld [vmem:[#allocation2 + $0xf0] sm:$0xff]
    %v122 = vld [vmem:[#allocation2 + $0xf8] sm:$0xff]
    %v123 = vld [vmem:[%s4] sm:$0x3]
    %v125 = vlaneseq
    %v126 = vshrl.u32 %v125, 7
    %v127 = vsub.s32 0, %v126
    %v128 = vrot.slane %v123, %v127
    %v129 = vlaneseq
    %v130 = vshrl.u32 %v129, 7
    %v131 = vsub.s32 1, %v130
    %v132 = vrot.slane %v123, %v131
    %135 = vmatprep.subr.mxu0 %v92
    %136 = vmatpush1.msra.mxu0 %v91
    %137 = vmatprep.subr.mxu0 %v94
    %138 = vmatpush1.msra.mxu0 %v93
    %139 = vmatprep.subr.mxu0 %v96
    %140 = vmatpush1.msra.mxu0 %v95
    %141 = vmatprep.subr.mxu0 %v98
    %142 = vmatpush1.msra.mxu0 %v97
    %143 = vmatprep.subr.mxu0 %v100
    %144 = vmatpush1.msra.mxu0 %v99
    %145 = vmatprep.subr.mxu0 %v102
    %146 = vmatpush1.msra.mxu0 %v101
    %147 = vmatprep.subr.mxu0 %v104
    %148 = vmatpush1.msra.mxu0 %v103
    %149 = vmatprep.subr.mxu0 %v106
    %150 = vmatpush1.msra.mxu0 %v105
    %151 = vmatprep.subr.mxu0 %v108
    %152 = vmatpush1.msra.mxu0 %v107
    %153 = vmatprep.subr.mxu0 %v110
    %154 = vmatpush1.msra.mxu0 %v109
    %155 = vmatprep.subr.mxu0 %v112
    %156 = vmatpush1.msra.mxu0 %v111
    %157 = vmatprep.subr.mxu0 %v114
    %158 = vmatpush1.msra.mxu0 %v113
    %159 = vmatprep.subr.mxu0 %v116
    %160 = vmatpush1.msra.mxu0 %v115
    %161 = vmatprep.subr.mxu0 %v118
    %162 = vmatpush1.msra.mxu0 %v117
    %163 = vmatprep.subr.mxu0 %v120
    %164 = vmatpush1.msra.mxu0 %v119
    %165 = vmatprep.subr.mxu0 %v122
    %166 = vmatpush1.msra.mxu0 %v121
    %167 = vmatprep.subr.mxu0 0.0
    %168 = vmatpush1.msra.mxu0 0.0
    %169 = vmatprep.subr.mxu0 0.0
    %170 = vmatpush1.msra.mxu0 0.0
    %171 = vmatprep.subr.mxu0 0.0
    %172 = vmatpush1.msra.mxu0 0.0
    %173 = vmatprep.subr.mxu0 0.0
    %174 = vmatpush1.msra.mxu0 0.0
    %175 = vmatprep.subr.mxu0 0.0
    %176 = vmatpush1.msra.mxu0 0.0
    %177 = vmatprep.subr.mxu0 0.0
    %178 = vmatpush1.msra.mxu0 0.0
    %179 = vmatprep.subr.mxu0 0.0
    %180 = vmatpush1.msra.mxu0 0.0
    %181 = vmatprep.subr.mxu0 0.0
    %182 = vmatpush1.msra.mxu0 0.0
    %183 = vmatprep.subr.mxu0 0.0
    %184 = vmatpush1.msra.mxu0 0.0
    %185 = vmatprep.subr.mxu0 0.0
    %186 = vmatpush1.msra.mxu0 0.0
    %187 = vmatprep.subr.mxu0 0.0
    %188 = vmatpush1.msra.mxu0 0.0
    %189 = vmatprep.subr.mxu0 0.0
    %190 = vmatpush1.msra.mxu0 0.0
    %191 = vmatprep.subr.mxu0 0.0
    %192 = vmatpush1.msra.mxu0 0.0
    %193 = vmatprep.subr.mxu0 0.0
    %194 = vmatpush1.msra.mxu0 0.0
    %195 = vmatprep.subr.mxu0 0.0
    %196 = vmatpush1.msra.mxu0 0.0
    %197 = vmatprep.subr.mxu0 0.0
    %198 = vmatpush1.msra.mxu0 0.0
    %199 = vmatprep.mubr.f32.mxu0 0.0
    %200 = vmatmul.mubr.f32.gmra.mrb[0].mxu0 %v90
    %v201 = vpop.f32.mrb[0].mxu0
    %v202 = vadd.f32 %v128, %v201
    %v203 = vpop.f32.mrb[0].mxu0
    %v204 = vadd.f32 %v132, %v203
    %205 = vdwg.mxu0
    %v206 = vxor.u32 %v202, 2147483648
    %v207 = vxor.u32 %v204, 2147483648
    %v208 = vmul.f32 %v206, 1.442695
    %v209 = vpow.pop %v208
    %v210 = vmul.f32 %v207, 1.442695
    %v211 = vpow.pop %v210
    %v212 = vadd.f32 %v209, 1.0
    %v213 = vadd.f32 %v211, 1.0
    %v214 = vrcp.pop %v212
    %v215 = vmul.f32 1.0, %v214
    %v216 = vrcp.pop %v213
    %v217 = vmul.f32 1.0, %v216
    %v218 = vld [vmem:[#allocation5] sm:$0xff]
    %v219 = vld [vmem:[#allocation5 + $0x8] sm:$0xff]
    %v220 = vld [vmem:[#allocation5 + $0x10] sm:$0xff]
    %v221 = vld [vmem:[#allocation5 + $0x18] sm:$0xff]
    %v222 = vld [vmem:[#allocation5 + $0x20] sm:$0xff]
    %v223 = vld [vmem:[#allocation5 + $0x28] sm:$0xff]
    %v224 = vld [vmem:[#allocation5 + $0x30] sm:$0xff]
    %v225 = vld [vmem:[#allocation5 + $0x38] sm:$0xff]
    %v226 = vld [vmem:[#allocation5 + $0x40] sm:$0xff]
    %v227 = vld [vmem:[#allocation5 + $0x48] sm:$0xff]
    %v228 = vld [vmem:[#allocation5 + $0x50] sm:$0xff]
    %v229 = vld [vmem:[#allocation5 + $0x58] sm:$0xff]
    %v230 = vld [vmem:[#allocation5 + $0x60] sm:$0xff]
    %v231 = vld [vmem:[#allocation5 + $0x68] sm:$0xff]
    %v232 = vld [vmem:[#allocation5 + $0x70] sm:$0xff]
    %v233 = vld [vmem:[#allocation5 + $0x78] sm:$0xff]
    %v234 = vld [vmem:[#allocation5 + $0x80] sm:$0xff]
    %v235 = vld [vmem:[#allocation5 + $0x88] sm:$0xff]
    %v236 = vld [vmem:[#allocation5 + $0x90] sm:$0xff]
    %v237 = vld [vmem:[#allocation5 + $0x98] sm:$0xff]
    %v238 = vld [vmem:[#allocation5 + $0xa0] sm:$0xff]
    %v239 = vld [vmem:[#allocation5 + $0xa8] sm:$0xff]
    %v240 = vld [vmem:[#allocation5 + $0xb0] sm:$0xff]
    %v241 = vld [vmem:[#allocation5 + $0xb8] sm:$0xff]
    %v242 = vld [vmem:[#allocation5 + $0xc0] sm:$0xff]
    %v243 = vld [vmem:[#allocation5 + $0xc8] sm:$0xff]
    %v244 = vld [vmem:[#allocation5 + $0xd0] sm:$0xff]
    %v245 = vld [vmem:[#allocation5 + $0xd8] sm:$0xff]
    %v246 = vld [vmem:[#allocation5 + $0xe0] sm:$0xff]
    %v247 = vld [vmem:[#allocation5 + $0xe8] sm:$0xff]
    %v248 = vld [vmem:[#allocation5 + $0xf0] sm:$0xff]
    %v249 = vld [vmem:[#allocation5 + $0xf8] sm:$0xff]
    %v250 = vld [vmem:[%s6] sm:$0x1]
    %v252 = vlaneseq
    %v253 = vshrl.u32 %v252, 7
    %v254 = vsub.s32 0, %v253
    %v255 = vrot.slane %v250, %v254
    %257 = vmatprep.subr.mxu0 0.0
    %258 = vmatpush1.msra.mxu0 %v218
    %259 = vmatprep.subr.mxu0 0.0
    %260 = vmatpush1.msra.mxu0 %v219
    %261 = vmatprep.subr.mxu0 0.0
    %262 = vmatpush1.msra.mxu0 %v220
    %263 = vmatprep.subr.mxu0 0.0
    %264 = vmatpush1.msra.mxu0 %v221
    %265 = vmatprep.subr.mxu0 0.0
    %266 = vmatpush1.msra.mxu0 %v222
    %267 = vmatprep.subr.mxu0 0.0
    %268 = vmatpush1.msra.mxu0 %v223
    %269 = vmatprep.subr.mxu0 0.0
    %270 = vmatpush1.msra.mxu0 %v224
    %271 = vmatprep.subr.mxu0 0.0
    %272 = vmatpush1.msra.mxu0 %v225
    %273 = vmatprep.subr.mxu0 0.0
    %274 = vmatpush1.msra.mxu0 %v226
    %275 = vmatprep.subr.mxu0 0.0
    %276 = vmatpush1.msra.mxu0 %v227
    %277 = vmatprep.subr.mxu0 0.0
    %278 = vmatpush1.msra.mxu0 %v228
    %279 = vmatprep.subr.mxu0 0.0
    %280 = vmatpush1.msra.mxu0 %v229
    %281 = vmatprep.subr.mxu0 0.0
    %282 = vmatpush1.msra.mxu0 %v230
    %283 = vmatprep.subr.mxu0 0.0
    %284 = vmatpush1.msra.mxu0 %v231
    %285 = vmatprep.subr.mxu0 0.0
    %286 = vmatpush1.msra.mxu0 %v232
    %287 = vmatprep.subr.mxu0 0.0
    %288 = vmatpush1.msra.mxu0 %v233
    %289 = vmatprep.subr.mxu0 0.0
    %290 = vmatpush1.msra.mxu0 %v234
    %291 = vmatprep.subr.mxu0 0.0
    %292 = vmatpush1.msra.mxu0 %v235
    %293 = vmatprep.subr.mxu0 0.0
    %294 = vmatpush1.msra.mxu0 %v236
    %295 = vmatprep.subr.mxu0 0.0
    %296 = vmatpush1.msra.mxu0 %v237
    %297 = vmatprep.subr.mxu0 0.0
    %298 = vmatpush1.msra.mxu0 %v238
    %299 = vmatprep.subr.mxu0 0.0
    %300 = vmatpush1.msra.mxu0 %v239
    %301 = vmatprep.subr.mxu0 0.0
    %302 = vmatpush1.msra.mxu0 %v240
    %303 = vmatprep.subr.mxu0 0.0
    %304 = vmatpush1.msra.mxu0 %v241
    %305 = vmatprep.subr.mxu0 0.0
    %306 = vmatpush1.msra.mxu0 %v242
    %307 = vmatprep.subr.mxu0 0.0
    %308 = vmatpush1.msra.mxu0 %v243
    %309 = vmatprep.subr.mxu0 0.0
    %310 = vmatpush1.msra.mxu0 %v244
    %311 = vmatprep.subr.mxu0 0.0
    %312 = vmatpush1.msra.mxu0 %v245
    %313 = vmatprep.subr.mxu0 0.0
    %314 = vmatpush1.msra.mxu0 %v246
    %315 = vmatprep.subr.mxu0 0.0
    %316 = vmatpush1.msra.mxu0 %v247
    %317 = vmatprep.subr.mxu0 0.0
    %318 = vmatpush1.msra.mxu0 %v248
    %319 = vmatprep.subr.mxu0 0.0
    %320 = vmatpush1.msra.mxu0 %v249
    %321 = vmatprep.mubr.f32.mxu0 %v217
    %322 = vmatmul.mubr.f32.gmra.mrb[0].mxu0 %v215
    %v323 = vpop.f32.mrb[0].mxu0
    %v324 = vadd.f32 %v255, %v323
    %v325 = vpop.f32.mrb[0].mxu0
    %326 = vdwg.mxu0
    %327 = vst [vmem:[#allocation7] sm:$0xff] %v324
    // Predicated region
    $region38: #{tpu_custom_call.1} parent=1 // pred_check
      _
    $region39: #{tpu_custom_call.1} parent=1 // pred_check_branch
      %329 = sbr.rel (0) target = $region41
    $region40: #{tpu_custom_call.1} parent=1 // pred_region
      %s331 = ssub.s32 128, 128
      %332 = vsyncadd [#allocation4], %s331
      %s334 = sshll.u32 [#allocation7], 4
      %s335 = int_to_ptr.vmem [resolvable:$true] %s334
      %337 = dma.vmem_to_hbm [thread:$0]  %s335, 128, %s7, [#allocation4]
    $region41: #{tpu_custom_call.1} parent=1 // pred_fallthru
      _
    // Predicated region
    $region42: #{tpu_custom_call.1} parent=1 // pred_check
      _
    $region43: #{tpu_custom_call.1} parent=1 // pred_check_branch
      %339 = sbr.rel (0) target = $region45
    $region44: #{tpu_custom_call.1} parent=1 // pred_region
      %340 = dma.done [#allocation4], 128
    $region45: #{tpu_custom_call.1} parent=1 // pred_fallthru
      _
    %341 = vsyncpa [#allocation3], 1
    %342 = vsyncpa [#allocation6], 1
    %343 = vsyncpa [#allocation4], 1

</llo_original>
